<compile_context>
chip_gen: v5e
topology: v5e:2x2
jax: 0.10.0
libtpu: 0.0.40
codegen_flags: <defaults>
</compile_context>

<pallas_src>
import functools

import jax
import jax.numpy as jnp
from jax import lax
from jax.experimental import pallas as pl
from jax.experimental.pallas import tpu as pltpu


def _round_up(x, m):
    return (x + m - 1) // m * m


# ---------------------------------------------------------------------------
# Pass 1: conv-as-GEMM (bf16 MXU operands, f32 accumulate) + per-channel stats
# ---------------------------------------------------------------------------
def _conv_stats_kernel(patches_ref, w_ref, conv_ref, stats_ref):
    i = pl.program_id(0)

    x = jnp.dot(patches_ref[...], w_ref[...],
                preferred_element_type=jnp.float32)            # (TILE_M, C_pad) f32
    conv_ref[...] = x

    s1 = jnp.sum(x, axis=0, keepdims=True)                     # (1, C_pad)
    s2 = jnp.sum(x * x, axis=0, keepdims=True)                 # (1, C_pad)
    upd = jnp.concatenate(
        [s1, s2, jnp.zeros((6, s1.shape[1]), jnp.float32)], axis=0)  # (8, C_pad)

    @pl.when(i == 0)
    def _():
        stats_ref[...] = jnp.zeros_like(stats_ref)

    stats_ref[...] += upd


# ---------------------------------------------------------------------------
# Pass 2: fused BN affine (y = x*a + b) + activation
# ---------------------------------------------------------------------------
def _bn_act_kernel(conv_ref, a_ref, b_ref, o_ref, *, use_act, slope):
    y = conv_ref[...] * a_ref[...] + b_ref[...]
    if use_act:
        y = jnp.maximum(y, 0.0)                    # nn.ReLU()
    else:
        y = jnp.where(y >= 0.0, y, slope * y)      # nn.LeakyReLU(0.2)
    o_ref[...] = y.astype(o_ref.dtype)


def block_forward(x_nchw, weight_oihw, gamma, beta, *, stride, padding,
                  eps=0.8, use_act=True, tile_m=512):
    """Forward of Block (downsample=True): act(bn(conv(x))). Returns NCHW."""
    N, C, H, W = x_nchw.shape
    Cout, Cin, KH, KW = weight_oihw.shape
    assert Cin == C
    OH = (H + 2 * padding - KH) // stride + 1
    OW = (W + 2 * padding - KW) // stride + 1

    # --- glue: im2col in plain JAX (bf16 to halve the HBM slab) -------------
    xb = x_nchw.astype(jnp.bfloat16)
    xp = jnp.pad(xb, ((0, 0), (0, 0), (padding, padding), (padding, padding)))
    cols = []
    for i in range(KH):
        for j in range(KW):
            cols.append(xp[:, :, i:i + stride * OH:stride, j:j + stride * OW:stride])
    patches = jnp.stack(cols, axis=2)                       # (N, C, KH*KW, OH, OW)
    patches = patches.transpose(0, 3, 4, 1, 2).reshape(N * OH * OW, C * KH * KW)

    M, K = patches.shape
    C_pad = _round_up(Cout, 128)                            # lane-dense output channels
    tile = min(tile_m, _round_up(M, 16))                    # 16: bf16 sublane packing
    M_pad = _round_up(M, tile)
    n_tiles = M_pad // tile

    # Zero-padded rows / channels contribute exactly 0 to sum and sumsq, so dividing by
    # the *true* M below keeps the batch statistics unbiased.
    patches = jnp.pad(patches, ((0, M_pad - M), (0, 0)))
    w2d = weight_oihw.reshape(Cout, K).T.astype(jnp.bfloat16)     # (K, Cout), (C,kh,kw) order
    w2d = jnp.pad(w2d, ((0, 0), (0, C_pad - Cout)))
    gamma_p = jnp.pad(gamma.astype(jnp.float32), (0, C_pad - Cout))
    beta_p = jnp.pad(beta.astype(jnp.float32), (0, C_pad - Cout))

    # --- pass 1: conv GEMM + stats accumulation ------------------------------
    conv_out, stats = pl.pallas_call(
        _conv_stats_kernel,
        out_shape=(jax.ShapeDtypeStruct((M_pad, C_pad), jnp.float32),
                   jax.ShapeDtypeStruct((8, C_pad), jnp.float32)),
        grid=(n_tiles,),
        in_specs=[
            pl.BlockSpec((tile, K), lambda i: (i, 0)),
            pl.BlockSpec((K, C_pad), lambda i: (0, 0)),
        ],
        out_specs=(
            pl.BlockSpec((tile, C_pad), lambda i: (i, 0)),
            pl.BlockSpec((8, C_pad), lambda i: (0, 0)),      # resident accumulator
        ),
        compiler_params=pltpu.CompilerParams(
            dimension_semantics=("arbitrary",),              # stats reduce over M tiles
            vmem_limit_bytes=32 * 1024 * 1024),
    )(patches, w2d)

    # --- glue: fold BN into a single affine (a, b) ---------------------------
    inv_m = 1.0 / float(M)
    mean = stats[0] * inv_m
    var = stats[1] * inv_m - mean * mean
    a = gamma_p * lax.rsqrt(var + eps)
    b = beta_p - mean * a
    a2d = a.reshape(1, C_pad)
    b2d = b.reshape(1, C_pad)

    # --- pass 2: normalize + activation (independent per M tile) -------------
    kernel2 = functools.partial(_bn_act_kernel, use_act=use_act, slope=0.2)
    out2d = pl.pallas_call(
        kernel2,
        out_shape=jax.ShapeDtypeStruct((M_pad, C_pad), jnp.float32),
        grid=(n_tiles,),
        in_specs=[
            pl.BlockSpec((tile, C_pad), lambda i: (i, 0)),
            pl.BlockSpec((1, C_pad), lambda i: (0, 0)),
            pl.BlockSpec((1, C_pad), lambda i: (0, 0)),
        ],
        out_specs=pl.BlockSpec((tile, C_pad), lambda i: (i, 0)),
        compiler_params=pltpu.CompilerParams(
            dimension_semantics=("parallel",),               # megacore-shardable
            vmem_limit_bytes=32 * 1024 * 1024),
    )(conv_out, a2d, b2d)

    out = out2d[:M, :Cout].reshape(N, OH, OW, Cout)
    # NCHW for PyTorch parity.
    # TODO(synk): let downstream layers consume NHWC directly to skip this transpose.
    return out.transpose(0, 3, 1, 2)


# ---------------------------------------------------------------------------
# References
# ---------------------------------------------------------------------------
def _reference_f32(x, weight, gamma, beta, *, stride, padding, eps, use_act):
    y = lax.conv_general_dilated(
        x, weight, (stride, stride), [(padding, padding)] * 2,
        dimension_numbers=("NCHW", "OIHW", "NCHW"))
    mean = jnp.mean(y, axis=(0, 2, 3), keepdims=True)
    var = jnp.mean((y - mean) ** 2, axis=(0, 2, 3), keepdims=True)
    yn = (y - mean) / jnp.sqrt(var + eps)
    yn = yn * gamma.reshape(1, -1, 1, 1) + beta.reshape(1, -1, 1, 1)
    return jnp.maximum(yn, 0.0) if use_act else jnp.where(yn >= 0, yn, 0.2 * yn)


def _reference_bf16_conv(x, weight, gamma, beta, *, stride, padding, eps, use_act):
    # Same numerical scheme as the kernel: bf16 conv operands, f32 accumulation + f32 BN.
    y = lax.conv_general_dilated(
        x.astype(jnp.bfloat16), weight.astype(jnp.bfloat16), (stride, stride),
        [(padding, padding)] * 2, dimension_numbers=("NCHW", "OIHW", "NCHW"),
        preferred_element_type=jnp.float32)
    mean = jnp.mean(y, axis=(0, 2, 3), keepdims=True)
    var = jnp.mean((y - mean) ** 2, axis=(0, 2, 3), keepdims=True)
    yn = (y - mean) / jnp.sqrt(var + eps)
    yn = yn * gamma.reshape(1, -1, 1, 1) + beta.reshape(1, -1, 1, 1)
    return jnp.maximum(yn, 0.0) if use_act else jnp.where(yn >= 0, yn, 0.2 * yn)


if __name__ == "__main__":
    # Block(in_channels=4, out_channels=8, kernel_size=4, stride=2, padding=1)
    in_channels, out_channels, kernel_size, stride, padding = 4, 8, 4, 2, 1
    N, H, W = 2, 16, 16

    key = jax.random.PRNGKey(0)
    kx, kw, kg, kb = jax.random.split(key, 4)
    x = jax.random.normal(kx, (N, in_channels, H, W), dtype=jnp.float32)
    weight = 0.02 * jax.random.normal(
        kw, (out_channels, in_channels, kernel_size, kernel_size), dtype=jnp.float32)
    gamma = 1.0 + 0.1 * jax.random.normal(kg, (out_channels,), dtype=jnp.float32)
    beta = 0.1 * jax.random.normal(kb, (out_channels,), dtype=jnp.float32)

    out = block_forward(x, weight, gamma, beta, stride=stride, padding=padding,
                        eps=0.8, use_act=True)
    out = jax.block_until_ready(out)
    assert out.shape == (N, out_channels, H // 2, W // 2), out.shape

    # Tight check against a reference using the same bf16-operand / f32-accum conv.
    ref_bf16 = _reference_bf16_conv(x, weight, gamma, beta, stride=stride,
                                    padding=padding, eps=0.8, use_act=True)
    err_bf16 = float(jnp.max(jnp.abs(out - ref_bf16)))
    assert jnp.allclose(out, ref_bf16, atol=2e-3, rtol=2e-3), err_bf16

    # Looser check against the full-f32 reference (difference is bf16 MXU-operand rounding).
    ref_f32 = _reference_f32(x, weight, gamma, beta, stride=stride,
                             padding=padding, eps=0.8, use_act=True)
    err_f32 = float(jnp.max(jnp.abs(out - ref_f32)))
    assert jnp.allclose(out, ref_f32, atol=3e-2, rtol=3e-2), err_f32

    print("KERNEL_OK")
</pallas_src>

<mosaic_0001>
module attributes {stable_mosaic.version = 11 : i64} {
  func.func @_conv_stats_kernel(%arg0: i32, %arg1: memref<128x64xbf16, #tpu.memory_space<vmem>>, %arg2: memref<64x128xbf16, #tpu.memory_space<vmem>>, %arg3: memref<128x128xf32, #tpu.memory_space<vmem>>, %arg4: memref<8x128xf32, #tpu.memory_space<vmem>>) attributes {dimension_semantics = [#tpu.dimension_semantics<arbitrary>], iteration_bounds = array<i64: 1>, scalar_prefetch = 0 : i64, scratch_operands = 0 : i64, tpu.core_type = #tpu.core_type<tc>, window_params = [{transform_indices = @transform_0, window_bounds = array<i64: 128, 64>}, {pipeline_mode = #tpu.pipeline_mode<synchronous>, transform_indices = @transform_1, window_bounds = array<i64: 64, 128>}, {transform_indices = @transform_2, window_bounds = array<i64: 128, 128>}, {pipeline_mode = #tpu.pipeline_mode<synchronous>, transform_indices = @transform_3, window_bounds = array<i64: 8, 128>}]} {
    %c0 = arith.constant 0 : index
    %c0_0 = arith.constant 0 : index
    %0 = vector.load %arg1[%c0, %c0_0] : memref<128x64xbf16, #tpu.memory_space<vmem>>, vector<128x64xbf16>
    %c0_1 = arith.constant 0 : index
    %c0_2 = arith.constant 0 : index
    %1 = vector.load %arg2[%c0_1, %c0_2] : memref<64x128xbf16, #tpu.memory_space<vmem>>, vector<64x128xbf16>
    %cst = arith.constant dense<0.000000e+00> : vector<128x128xf32>
    %2 = tpu.matmul %0, %1, %cst {dimension_numbers = #tpu.dot_dimension_numbers<[1], [0], [0], [1], [0, 0, 1, 1], [], []>} : vector<128x64xbf16>, vector<64x128xbf16>, vector<128x128xf32> -> vector<128x128xf32>
    %c0_3 = arith.constant 0 : index
    %c0_4 = arith.constant 0 : index
    %3 = vector.load %arg3[%c0_3, %c0_4] : memref<128x128xf32, #tpu.memory_space<vmem>>, vector<128x128xf32>
    tpu.vector_store %arg3[%c0_3, %c0_4], %2 {strides = array<i32>} : memref<128x128xf32, #tpu.memory_space<vmem>>, vector<128x128xf32>,
    %cst_5 = arith.constant dense<0.000000e+00> : vector<128xf32>
    %4 = vector.multi_reduction <add>, %2, %cst_5 [0] : vector<128x128xf32> to vector<128xf32>
    %5 = vector.shape_cast %4 : vector<128xf32> to vector<1x128xf32>
    %6 = arith.mulf %2, %2 : vector<128x128xf32>
    %cst_6 = arith.constant dense<0.000000e+00> : vector<128xf32>
    %7 = vector.multi_reduction <add>, %6, %cst_6 [0] : vector<128x128xf32> to vector<128xf32>
    %8 = vector.shape_cast %7 : vector<128xf32> to vector<1x128xf32>
    %cst_7 = arith.constant 0.000000e+00 : f32
    %9 = vector.broadcast %cst_7 : f32 to vector<6x128xf32>
    %10 = tpu.concatenate %5, %8, %9 in 0 : vector<1x128xf32>, vector<1x128xf32>, vector<6x128xf32> -> vector<8x128xf32>
    %c0_i32 = arith.constant 0 : i32
    %11 = arith.cmpi eq, %arg0, %c0_i32 : i32
    %12 = arith.extui %11 : i1 to i32
    %c0_i32_8 = arith.constant 0 : i32
    %13 = arith.cmpi ne, %12, %c0_i32_8 : i32
    scf.if %13 {
      %cst_13 = arith.constant 0.000000e+00 : f32
      %17 = vector.broadcast %cst_13 : f32 to vector<8x128xf32>
      %c0_14 = arith.constant 0 : index
      %c0_15 = arith.constant 0 : index
      %18 = vector.load %arg4[%c0_14, %c0_15] : memref<8x128xf32, #tpu.memory_space<vmem>>, vector<8x128xf32>
      tpu.vector_store %arg4[%c0_14, %c0_15], %17 {strides = array<i32>} : memref<8x128xf32, #tpu.memory_space<vmem>>, vector<8x128xf32>,
    } else {
    }
    %c0_9 = arith.constant 0 : index
    %c0_10 = arith.constant 0 : index
    %14 = vector.load %arg4[%c0_9, %c0_10] : memref<8x128xf32, #tpu.memory_space<vmem>>, vector<8x128xf32>
    %15 = arith.addf %14, %10 : vector<8x128xf32>
    %c0_11 = arith.constant 0 : index
    %c0_12 = arith.constant 0 : index
    %16 = vector.load %arg4[%c0_11, %c0_12] : memref<8x128xf32, #tpu.memory_space<vmem>>, vector<8x128xf32>
    tpu.vector_store %arg4[%c0_11, %c0_12], %15 {strides = array<i32>} : memref<8x128xf32, #tpu.memory_space<vmem>>, vector<8x128xf32>,
    return
  }
  func.func @transform_0(%arg0: i32) -> (i32, i32) {
    %c0_i32 = arith.constant 0 : i32
    %c0_i32_0 = arith.constant 0 : i32
    return %arg0, %c0_i32 : i32, i32
  }
  func.func @transform_1(%arg0: i32) -> (i32, i32) {
    %c0_i32 = arith.constant 0 : i32
    %c0_i32_0 = arith.constant 0 : i32
    %c0_i32_1 = arith.constant 0 : i32
    return %c0_i32, %c0_i32_0 : i32, i32
  }
  func.func @transform_2(%arg0: i32) -> (i32, i32) {
    %c0_i32 = arith.constant 0 : i32
    %c0_i32_0 = arith.constant 0 : i32
    return %arg0, %c0_i32 : i32, i32
  }
  func.func @transform_3(%arg0: i32) -> (i32, i32) {
    %c0_i32 = arith.constant 0 : i32
    %c0_i32_0 = arith.constant 0 : i32
    %c0_i32_1 = arith.constant 0 : i32
    return %c0_i32, %c0_i32_0 : i32, i32
  }
}

</mosaic_0001>

<llo_original>
// kernel: tpu_custom_call.1
$region0: #{tpu_custom_call.1}
  #allocation0 [shape = 'u32[]', space=smem, size = 0x4, offset = 0x4, fixed_abs, tag = 'smem constant byte address 0x4 - core index']
  #allocation1 [shape = 'u32[72,128]{1,0:T(1,128)}', space=vmem, size = 0x9000, scoped, tag = 'internal scratch']
  %s0 = inlined_call_operand.vmem [shape: bf16[128,64], index: 0, kind: input, shape index: {}]
  %s1 = inlined_call_operand.vmem [shape: bf16[64,128], index: 1, kind: input, shape index: {}]
  %s2 = inlined_call_operand.hbm [shape: f32[128,128], index: 2, kind: output, shape index: {0}]
  %s3 = inlined_call_operand.hbm [shape: f32[8,128], index: 3, kind: output, shape index: {1}]
  %4 = xla_tuple %s2, %s3
  %s5 = sld [smem:[#allocation0]]
  $region30: #{tpu_custom_call.1} parent=0
    _
  %s7 = ssub.s32 1, %s5
  %s8 = scalar_select 0, %s7, %s5
  $region1: #{tpu_custom_call.1} parent=0
    #allocation2 [shape = 'u8[65536]{0}', space=vmem, size = 0x10000, scoped, tag = 'output window, operand 0, single buffered']
    #allocation3 [shape = 's32[1]{0}', space=sflag, size = 0x4, scoped, tag = 'scoped memory for tpu_custom_call.1']
    #allocation4 [shape = 'u8[4096]{0}', space=vmem, size = 0x1000, scoped, tag = 'output window, operand 1, single buffered']
    #allocation5 [shape = 's32[1]{0}', space=sflag, size = 0x4, scoped, tag = 'scoped memory for tpu_custom_call.1']
    %9 = vsyncpa [#allocation3], 0
    %10 = vsyncpa [#allocation5], 0
    // Predicated region
    $region2: #{tpu_custom_call.1} parent=1 // pred_check
      _
    $region3: #{tpu_custom_call.1} parent=1 // pred_check_branch
      %12 = sbr.rel (0) target = $region5
    $region4: #{tpu_custom_call.1} parent=1 // pred_region
      _
    $region5: #{tpu_custom_call.1} parent=1 // pred_fallthru
      _
    // Predicated region
    $region6: #{tpu_custom_call.1} parent=1 // pred_check
      _
    $region7: #{tpu_custom_call.1} parent=1 // pred_check_branch
      %14 = sbr.rel (0) target = $region9
    $region8: #{tpu_custom_call.1} parent=1 // pred_region
      _
    $region9: #{tpu_custom_call.1} parent=1 // pred_fallthru
      _
    %v16 = vld [vmem:[%s0] sm:$0xf]
    %v17 = vld [vmem:[%s0 + $0x4] sm:$0xf]
    %v18 = vld [vmem:[%s0 + $0x8] sm:$0xf]
    %v19 = vld [vmem:[%s0 + $0xc] sm:$0xf]
    %v20 = vld [vmem:[%s0 + $0x10] sm:$0xf]
    %v21 = vld [vmem:[%s0 + $0x14] sm:$0xf]
    %v22 = vld [vmem:[%s0 + $0x18] sm:$0xf]
    %v23 = vld [vmem:[%s0 + $0x1c] sm:$0xf]
    %v24 = vld [vmem:[%s0 + $0x20] sm:$0xf]
    %v25 = vld [vmem:[%s0 + $0x24] sm:$0xf]
    %v26 = vld [vmem:[%s0 + $0x28] sm:$0xf]
    %v27 = vld [vmem:[%s0 + $0x2c] sm:$0xf]
    %v28 = vld [vmem:[%s0 + $0x30] sm:$0xf]
    %v29 = vld [vmem:[%s0 + $0x34] sm:$0xf]
    %v30 = vld [vmem:[%s0 + $0x38] sm:$0xf]
    %v31 = vld [vmem:[%s0 + $0x3c] sm:$0xf]
    %v32 = vld [vmem:[%s1] sm:$0xf]
    %v33 = vld [vmem:[%s1 + $0x4] sm:$0xf]
    %v34 = vld [vmem:[%s1 + $0x8] sm:$0xf]
    %v35 = vld [vmem:[%s1 + $0xc] sm:$0xf]
    %v36 = vld [vmem:[%s1 + $0x10] sm:$0xf]
    %v37 = vld [vmem:[%s1 + $0x14] sm:$0xf]
    %v38 = vld [vmem:[%s1 + $0x18] sm:$0xf]
    %v39 = vld [vmem:[%s1 + $0x1c] sm:$0xf]
    %v56 = vunpack.c.l.b16 %v16
    %v57 = vunpack.c.l.b16 %v17
    %v58 = vunpack.c.l.b16 %v18
    %v59 = vunpack.c.l.b16 %v19
    %v60 = vunpack.c.l.b16 %v20
    %v61 = vunpack.c.l.b16 %v21
    %v62 = vunpack.c.l.b16 %v22
    %v63 = vunpack.c.l.b16 %v23
    %v64 = vunpack.c.l.b16 %v24
    %v65 = vunpack.c.l.b16 %v25
    %v66 = vunpack.c.l.b16 %v26
    %v67 = vunpack.c.l.b16 %v27
    %v68 = vunpack.c.l.b16 %v28
    %v69 = vunpack.c.l.b16 %v29
    %v70 = vunpack.c.l.b16 %v30
    %v71 = vunpack.c.l.b16 %v31
    %v72 = vpack.c.b16 %v57, %v56
    %v73 = vpack.c.b16 %v59, %v58
    %v74 = vpack.c.b16 %v61, %v60
    %v75 = vpack.c.b16 %v63, %v62
    %v76 = vpack.c.b16 %v65, %v64
    %v77 = vpack.c.b16 %v67, %v66
    %v78 = vpack.c.b16 %v69, %v68
    %v79 = vpack.c.b16 %v71, %v70
    %v88 = vunpack.c.l.b16 %v32
    %v89 = vunpack.c.l.b16 %v33
    %v90 = vunpack.c.l.b16 %v34
    %v91 = vunpack.c.l.b16 %v35
    %v92 = vunpack.c.l.b16 %v36
    %v93 = vunpack.c.l.b16 %v37
    %v94 = vunpack.c.l.b16 %v38
    %v95 = vunpack.c.l.b16 %v39
    %v96 = vpack.c.b16 %v89, %v88
    %v97 = vpack.c.b16 %v91, %v90
    %v98 = vpack.c.b16 %v93, %v92
    %v99 = vpack.c.b16 %v95, %v94
    %vm104 = vcmask 523264
    %v106 = vsel %vm104, %v72, 0
    %v109 = vsel %vm104, %v73, 0
    %v112 = vsel %vm104, %v74, 0
    %v115 = vsel %vm104, %v75, 0
    %v118 = vsel %vm104, %v76, 0
    %v121 = vsel %vm104, %v77, 0
    %v124 = vsel %vm104, %v78, 0
    %v127 = vsel %vm104, %v79, 0
    %129 = vmatpush.bf16.msra.mxu0 0
    %130 = vmatpush.bf16.msra.mxu0 0
    %131 = vmatpush.bf16.msra.mxu0 0
    %132 = vmatpush.bf16.msra.mxu0 0
    %133 = vmatpush.bf16.msra.mxu0 %v99
    %134 = vmatpush.bf16.msra.mxu0 %v98
    %135 = vmatpush.bf16.msra.mxu0 %v97
    %136 = vmatpush.bf16.msra.mxu0 %v96
    %137 = vmatmul.bf16.gmra.mxu0 %v106
    %v138 = vpop.f32.mrf.mxu0
    %v139 = vadd.f32 0.0, %v138
    %v140 = vpop.f32.mrf.mxu0
    %v141 = vadd.f32 0.0, %v140
    %142 = vmatmul.bf16.gmra.mxu0 %v109
    %v143 = vpop.f32.mrf.mxu0
    %v144 = vadd.f32 0.0, %v143
    %v145 = vpop.f32.mrf.mxu0
    %v146 = vadd.f32 0.0, %v145
    %147 = vmatmul.bf16.gmra.mxu0 %v112
    %v148 = vpop.f32.mrf.mxu0
    %v149 = vadd.f32 0.0, %v148
    %v150 = vpop.f32.mrf.mxu0
    %v151 = vadd.f32 0.0, %v150
    %152 = vmatmul.bf16.gmra.mxu0 %v115
    %v153 = vpop.f32.mrf.mxu0
    %v154 = vadd.f32 0.0, %v153
    %v155 = vpop.f32.mrf.mxu0
    %v156 = vadd.f32 0.0, %v155
    %157 = vmatmul.bf16.gmra.mxu0 %v118
    %v158 = vpop.f32.mrf.mxu0
    %v159 = vadd.f32 0.0, %v158
    %v160 = vpop.f32.mrf.mxu0
    %v161 = vadd.f32 0.0, %v160
    %162 = vmatmul.bf16.gmra.mxu0 %v121
    %v163 = vpop.f32.mrf.mxu0
    %v164 = vadd.f32 0.0, %v163
    %v165 = vpop.f32.mrf.mxu0
    %v166 = vadd.f32 0.0, %v165
    %167 = vmatmul.bf16.gmra.mxu0 %v124
    %v168 = vpop.f32.mrf.mxu0
    %v169 = vadd.f32 0.0, %v168
    %v170 = vpop.f32.mrf.mxu0
    %v171 = vadd.f32 0.0, %v170
    %172 = vmatmul.bf16.gmra.mxu0 %v127
    %v173 = vpop.f32.mrf.mxu0
    %v174 = vadd.f32 0.0, %v173
    %v175 = vpop.f32.mrf.mxu0
    %v176 = vadd.f32 0.0, %v175
    %177 = vdwg.mxu0
    %178 = vst [vmem:[#allocation2] sm:$0xff] %v139
    %179 = vst [vmem:[#allocation2 + $0x8] sm:$0xff] %v141
    %180 = vst [vmem:[#allocation2 + $0x10] sm:$0xff] %v144
    %181 = vst [vmem:[#allocation2 + $0x18] sm:$0xff] %v146
    %182 = vst [vmem:[#allocation2 + $0x20] sm:$0xff] %v149
    %183 = vst [vmem:[#allocation2 + $0x28] sm:$0xff] %v151
    %184 = vst [vmem:[#allocation2 + $0x30] sm:$0xff] %v154
    %185 = vst [vmem:[#allocation2 + $0x38] sm:$0xff] %v156
    %186 = vst [vmem:[#allocation2 + $0x40] sm:$0xff] %v159
    %187 = vst [vmem:[#allocation2 + $0x48] sm:$0xff] %v161
    %188 = vst [vmem:[#allocation2 + $0x50] sm:$0xff] %v164
    %189 = vst [vmem:[#allocation2 + $0x58] sm:$0xff] %v166
    %190 = vst [vmem:[#allocation2 + $0x60] sm:$0xff] %v169
    %191 = vst [vmem:[#allocation2 + $0x68] sm:$0xff] %v171
    %192 = vst [vmem:[#allocation2 + $0x70] sm:$0xff] %v174
    %193 = vst [vmem:[#allocation2 + $0x78] sm:$0xff] %v176
    %v194 = vadd.f32 %v139, %v141
    %v195 = vadd.f32 %v194, %v144
    %v196 = vadd.f32 %v195, %v146
    %v197 = vadd.f32 %v196, %v149
    %v198 = vadd.f32 %v197, %v151
    %v199 = vadd.f32 %v198, %v154
    %v200 = vadd.f32 %v199, %v156
    %v201 = vadd.f32 %v200, %v159
    %v202 = vadd.f32 %v201, %v161
    %v203 = vadd.f32 %v202, %v164
    %v204 = vadd.f32 %v203, %v166
    %v205 = vadd.f32 %v204, %v169
    %v206 = vadd.f32 %v205, %v171
    %v207 = vadd.f32 %v206, %v174
    %v208 = vadd.f32 %v207, %v176
    %v209 = vrot.slane %v208, 4
    %v210 = vadd.f32 %v208, %v209
    %v211 = vrot.slane %v210, 2
    %v212 = vadd.f32 %v210, %v211
    %v213 = vrot.slane %v212, 1
    %v214 = vadd.f32 %v212, %v213
    %v215 = vmul.f32 %v139, %v139
    %v216 = vmul.f32 %v141, %v141
    %v217 = vmul.f32 %v144, %v144
    %v218 = vmul.f32 %v146, %v146
    %v219 = vmul.f32 %v149, %v149
    %v220 = vmul.f32 %v151, %v151
    %v221 = vmul.f32 %v154, %v154
    %v222 = vmul.f32 %v156, %v156
    %v223 = vmul.f32 %v159, %v159
    %v224 = vmul.f32 %v161, %v161
    %v225 = vmul.f32 %v164, %v164
    %v226 = vmul.f32 %v166, %v166
    %v227 = vmul.f32 %v169, %v169
    %v228 = vmul.f32 %v171, %v171
    %v229 = vmul.f32 %v174, %v174
    %v230 = vmul.f32 %v176, %v176
    %v231 = vadd.f32 %v215, %v216
    %v232 = vadd.f32 %v231, %v217
    %v233 = vadd.f32 %v232, %v218
    %v234 = vadd.f32 %v233, %v219
    %v235 = vadd.f32 %v234, %v220
    %v236 = vadd.f32 %v235, %v221
    %v237 = vadd.f32 %v236, %v222
    %v238 = vadd.f32 %v237, %v223
    %v239 = vadd.f32 %v238, %v224
    %v240 = vadd.f32 %v239, %v225
    %v241 = vadd.f32 %v240, %v226
    %v242 = vadd.f32 %v241, %v227
    %v243 = vadd.f32 %v242, %v228
    %v244 = vadd.f32 %v243, %v229
    %v245 = vadd.f32 %v244, %v230
    %v246 = vrot.slane %v245, 4
    %v247 = vadd.f32 %v245, %v246
    %v248 = vrot.slane %v247, 2
    %v249 = vadd.f32 %v247, %v248
    %v250 = vrot.slane %v249, 1
    %v251 = vadd.f32 %v249, %v250
    %vm252 = vcmask 1040384
    %v253 = vsel %vm252, %v214, %v251
    %vm254 = vcmask 1041408
    %v255 = vsel %vm254, %v253, 0.0
    %p256 = scmp.eq.s32.totalorder 0, 0
    // Predicated region
    $region10: #{tpu_custom_call.1} parent=1 // pred_check
      %p257 = pneg %p256
    $region11: #{tpu_custom_call.1} parent=1 // pred_check_branch
      %259 = sbr.rel (%p257) target = $region13
    $region12: #{tpu_custom_call.1} parent=1 // pred_region
      %260 = vst [vmem:[#allocation4] sm:$0xff] 0.0
    $region13: #{tpu_custom_call.1} parent=1 // pred_fallthru
      _
    %v261 = vld [vmem:[#allocation4] sm:$0xff]
    %v262 = vadd.f32 %v261, %v255
    %263 = vst [vmem:[#allocation4] sm:$0xff] %v262
    // Predicated region
    $region14: #{tpu_custom_call.1} parent=1 // pred_check
      _
    $region15: #{tpu_custom_call.1} parent=1 // pred_check_branch
      %265 = sbr.rel (0) target = $region17
    $region16: #{tpu_custom_call.1} parent=1 // pred_region
      %267 = vsyncadd [#allocation3], 0
      %s268 = sshll.u32 [#allocation2], 4
      %s269 = int_to_ptr.vmem [resolvable:$true] %s268
      %s270 = sshll.u32 %s2, 4
      %s271 = int_to_ptr.hbm [resolvable:$true] %s270
      %276 = dma.vmem_to_hbm [thread:$0]  %s269, 2048, %s271, [#allocation3], 128, 128, 8
    $region17: #{tpu_custom_call.1} parent=1 // pred_fallthru
      _
    // Predicated region
    $region18: #{tpu_custom_call.1} parent=1 // pred_check
      _
    $region19: #{tpu_custom_call.1} parent=1 // pred_check_branch
      %278 = sbr.rel (0) target = $region21
    $region20: #{tpu_custom_call.1} parent=1 // pred_region
      %280 = vsyncadd [#allocation5], 0
      %s282 = sshll.u32 [#allocation4], 4
      %s283 = int_to_ptr.vmem [resolvable:$true] %s282
      %s284 = sshll.u32 %s3, 4
      %s285 = int_to_ptr.hbm [resolvable:$true] %s284
      %287 = dma.vmem_to_hbm [thread:$0]  %s283, 128, %s285, [#allocation5]
    $region21: #{tpu_custom_call.1} parent=1 // pred_fallthru
      _
    // Predicated region
    $region22: #{tpu_custom_call.1} parent=1 // pred_check
      _
    $region23: #{tpu_custom_call.1} parent=1 // pred_check_branch
      %289 = sbr.rel (0) target = $region25
    $region24: #{tpu_custom_call.1} parent=1 // pred_region
      %291 = dma.done [#allocation3], 2048
    $region25: #{tpu_custom_call.1} parent=1 // pred_fallthru
      _
    // Predicated region
    $region26: #{tpu_custom_call.1} parent=1 // pred_check
      _
    $region27: #{tpu_custom_call.1} parent=1 // pred_check_branch
      %293 = sbr.rel (0) target = $region29
    $region28: #{tpu_custom_call.1} parent=1 // pred_region
      %295 = dma.done [#allocation5], 128
    $region29: #{tpu_custom_call.1} parent=1 // pred_fallthru
      _
    %296 = vsyncpa [#allocation3], 1
    %297 = vsyncpa [#allocation5], 1

</llo_original>
